<compile_context>
chip_gen: v6e
topology: v6e:2x2x1
jax: 0.10.0
libtpu: 0.0.40
codegen_flags: <defaults>
</compile_context>

<pallas_src>
import math
import jax
import jax.numpy as jnp
from jax.experimental import pallas as pl
from jax.experimental.pallas import tpu as pltpu


def _mlp_kernel(x_ref, w1_ref, b1_ref, w2_ref, b2_ref, o_ref):
    # x_ref:  (TM, C)   activation row tile (rows = flattened tokens)
    # w1_ref: (C, H)    c_fc weight, VMEM-resident (transposed vs torch (H, C))
    # b1_ref: (1, H)    c_fc bias
    # w2_ref: (H, C)    c_proj weight, VMEM-resident (transposed vs torch (C, H))
    # b2_ref: (1, C)    c_proj bias
    # o_ref:  (TM, C)   output row tile
    x = x_ref[...]

    # --- c_fc: x @ W1 + b1  (MXU, f32 accumulation) ---
    h = jnp.dot(x, w1_ref[...], preferred_element_type=jnp.float32)
    h = h + b1_ref[...].astype(jnp.float32)

    # --- GELU, tanh approximation (matches nn.GELU(approximate='tanh')) ---
    c = math.sqrt(2.0 / math.pi)
    h = 0.5 * h * (1.0 + jnp.tanh(c * (h + 0.044715 * h * h * h)))

    # --- c_proj: gelu(h) @ W2 + b2  (MXU, f32 accumulation) ---
    # Cast the intermediate back to the weight dtype (native MXU throughput
    # for bf16 models; identity for f32).
    y = jnp.dot(h.astype(w2_ref.dtype), w2_ref[...],
                preferred_element_type=jnp.float32)
    y = y + b2_ref[...].astype(jnp.float32)

    o_ref[...] = y.astype(o_ref.dtype)


def mlp_pallas(x, w1, b1, w2, b2, *, tm=256):
    """x: (B, T, C); w1: (C, 4C); b1: (4C,); w2: (4C, C); b2: (C,)."""
    B, T, C = x.shape
    H = w1.shape[1]
    M = B * T
    x2d = x.reshape(M, C)
    b1_2d = b1.reshape(1, H)
    b2_2d = b2.reshape(1, C)

    # Row-tile size: MXU-friendly (multiple of 8 sublanes, ~256 rows for the
    # 256-wide MXU on v6e/v7x); shrink for tiny inputs and zero-pad M so the
    # grid divides evenly.
    TM = min(tm, max(8, ((M + 7) // 8) * 8))
    M_pad = ((M + TM - 1) // TM) * TM
    if M_pad != M:
        x2d = jnp.pad(x2d, ((0, M_pad - M), (0, 0)))
    grid = (M_pad // TM,)

    # VMEM estimate: streaming x/out tiles (double-buffered) + resident
    # weights/biases + the f32 (TM, H) intermediate. Clamp with headroom.
    act_bytes = jnp.dtype(x.dtype).itemsize
    w_bytes = jnp.dtype(w1.dtype).itemsize
    vmem_est = (2 * 2 * TM * C * act_bytes
                + 2 * (C * H + H * C + H + C) * w_bytes
                + TM * H * 4)
    vmem_limit = int(min(max(2 * vmem_est, 32 * 1024 * 1024),
                         100 * 1024 * 1024))

    out = pl.pallas_call(
        _mlp_kernel,
        out_shape=jax.ShapeDtypeStruct((M_pad, C), x.dtype),
        grid_spec=pltpu.PrefetchScalarGridSpec(
            num_scalar_prefetch=0,
            grid=grid,
            in_specs=[
                pl.BlockSpec((TM, C), lambda i: (i, 0)),   # activations stream
                pl.BlockSpec((C, H), lambda i: (0, 0)),    # W1 resident
                pl.BlockSpec((1, H), lambda i: (0, 0)),    # b1 resident
                pl.BlockSpec((H, C), lambda i: (0, 0)),    # W2 resident
                pl.BlockSpec((1, C), lambda i: (0, 0)),    # b2 resident
            ],
            out_specs=pl.BlockSpec((TM, C), lambda i: (i, 0)),
        ),
        compiler_params=pltpu.CompilerParams(
            # Row tiles are independent -> shard across v7x's 2 TensorCores.
            dimension_semantics=("parallel",),
            vmem_limit_bytes=vmem_limit,
        ),
    )(x2d, w1, b1_2d, w2, b2_2d)

    return out[:M].reshape(B, T, C)


def mlp_reference(x, w1, b1, w2, b2):
    h = x @ w1 + b1
    c = math.sqrt(2.0 / math.pi)
    h = 0.5 * h * (1.0 + jnp.tanh(c * (h + 0.044715 * h ** 3)))
    return h @ w2 + b2


if __name__ == "__main__":
    # Config: n_embd=32, hidden=4*32=128, batch=2, seq=8.
    B, T, C = 2, 8, 32
    H = 4 * C

    key = jax.random.PRNGKey(0)
    kx, k1, kb1, k2, kb2 = jax.random.split(key, 5)

    x = jax.random.normal(kx, (B, T, C), dtype=jnp.float32)

    # Deterministic param init (same shapes as nn.Linear; stored transposed so
    # the kernel computes x @ W, matching torch's x @ W.T).
    bound1 = 1.0 / math.sqrt(C)
    w1 = jax.random.uniform(k1, (C, H), minval=-bound1, maxval=bound1,
                            dtype=jnp.float32)
    b1 = jax.random.uniform(kb1, (H,), minval=-bound1, maxval=bound1,
                            dtype=jnp.float32)
    bound2 = 1.0 / math.sqrt(H)
    w2 = jax.random.uniform(k2, (H, C), minval=-bound2, maxval=bound2,
                            dtype=jnp.float32)
    b2 = jax.random.uniform(kb2, (C,), minval=-bound2, maxval=bound2,
                            dtype=jnp.float32)

    y = mlp_pallas(x, w1, b1, w2, b2)
    jax.block_until_ready(y)

    y_ref = mlp_reference(x, w1, b1, w2, b2)
    assert y.shape == (B, T, C)
    assert jnp.allclose(y, y_ref, atol=1e-5, rtol=1e-5)

    print("KERNEL_OK")
</pallas_src>

<mosaic_0001>
module attributes {stable_mosaic.version = 11 : i64} {
  func.func @_mlp_kernel(%arg0: i32, %arg1: memref<16x32xf32, #tpu.memory_space<vmem>>, %arg2: memref<32x128xf32, #tpu.memory_space<vmem>>, %arg3: memref<1x128xf32, #tpu.memory_space<vmem>>, %arg4: memref<128x32xf32, #tpu.memory_space<vmem>>, %arg5: memref<1x32xf32, #tpu.memory_space<vmem>>, %arg6: memref<16x32xf32, #tpu.memory_space<vmem>>) attributes {dimension_semantics = [#tpu.dimension_semantics<parallel>], iteration_bounds = array<i64: 1>, scalar_prefetch = 0 : i64, scratch_operands = 0 : i64, tpu.core_type = #tpu.core_type<tc>, window_params = [{transform_indices = @transform_0, window_bounds = array<i64: 16, 32>}, {pipeline_mode = #tpu.pipeline_mode<synchronous>, transform_indices = @transform_1, window_bounds = array<i64: 32, 128>}, {pipeline_mode = #tpu.pipeline_mode<synchronous>, transform_indices = @transform_2, window_bounds = array<i64: 1, 128>}, {pipeline_mode = #tpu.pipeline_mode<synchronous>, transform_indices = @transform_3, window_bounds = array<i64: 128, 32>}, {pipeline_mode = #tpu.pipeline_mode<synchronous>, transform_indices = @transform_4, window_bounds = array<i64: 1, 32>}, {transform_indices = @transform_5, window_bounds = array<i64: 16, 32>}]} {
    %c0 = arith.constant 0 : index
    %c0_0 = arith.constant 0 : index
    %0 = vector.load %arg1[%c0, %c0_0] : memref<16x32xf32, #tpu.memory_space<vmem>>, vector<16x32xf32>
    %c0_1 = arith.constant 0 : index
    %c0_2 = arith.constant 0 : index
    %1 = vector.load %arg2[%c0_1, %c0_2] : memref<32x128xf32, #tpu.memory_space<vmem>>, vector<32x128xf32>
    %cst = arith.constant dense<0.000000e+00> : vector<16x128xf32>
    %2 = tpu.matmul %0, %1, %cst {dimension_numbers = #tpu.dot_dimension_numbers<[1], [0], [0], [1], [0, 0, 1, 1], [], []>} : vector<16x32xf32>, vector<32x128xf32>, vector<16x128xf32> -> vector<16x128xf32>
    %c0_3 = arith.constant 0 : index
    %c0_4 = arith.constant 0 : index
    %3 = vector.load %arg3[%c0_3, %c0_4] : memref<1x128xf32, #tpu.memory_space<vmem>>, vector<1x128xf32>
    %4 = vector.broadcast %3 : vector<1x128xf32> to vector<16x128xf32>
    %5 = arith.addf %2, %4 : vector<16x128xf32>
    %cst_5 = arith.constant 5.000000e-01 : f32
    %6 = vector.broadcast %cst_5 : f32 to vector<16x128xf32>
    %7 = arith.mulf %6, %5 : vector<16x128xf32>
    %cst_6 = arith.constant 4.471500e-02 : f32
    %8 = vector.broadcast %cst_6 : f32 to vector<16x128xf32>
    %9 = arith.mulf %8, %5 : vector<16x128xf32>
    %10 = arith.mulf %9, %5 : vector<16x128xf32>
    %11 = arith.mulf %10, %5 : vector<16x128xf32>
    %12 = arith.addf %5, %11 : vector<16x128xf32>
    %cst_7 = arith.constant 0.797884583 : f32
    %13 = vector.broadcast %cst_7 : f32 to vector<16x128xf32>
    %14 = arith.mulf %13, %12 : vector<16x128xf32>
    %15 = math.tanh %14 : vector<16x128xf32>
    %cst_8 = arith.constant 1.000000e+00 : f32
    %16 = vector.broadcast %cst_8 : f32 to vector<16x128xf32>
    %17 = arith.addf %16, %15 : vector<16x128xf32>
    %18 = arith.mulf %7, %17 : vector<16x128xf32>
    %c0_9 = arith.constant 0 : index
    %c0_10 = arith.constant 0 : index
    %19 = vector.load %arg4[%c0_9, %c0_10] : memref<128x32xf32, #tpu.memory_space<vmem>>, vector<128x32xf32>
    %cst_11 = arith.constant dense<0.000000e+00> : vector<16x32xf32>
    %20 = tpu.matmul %18, %19, %cst_11 {dimension_numbers = #tpu.dot_dimension_numbers<[1], [0], [0], [1], [0, 0, 1, 1], [], []>} : vector<16x128xf32>, vector<128x32xf32>, vector<16x32xf32> -> vector<16x32xf32>
    %c0_12 = arith.constant 0 : index
    %c0_13 = arith.constant 0 : index
    %21 = vector.load %arg5[%c0_12, %c0_13] : memref<1x32xf32, #tpu.memory_space<vmem>>, vector<1x32xf32>
    %22 = vector.broadcast %21 : vector<1x32xf32> to vector<16x32xf32>
    %23 = arith.addf %20, %22 : vector<16x32xf32>
    %c0_14 = arith.constant 0 : index
    %c0_15 = arith.constant 0 : index
    %24 = vector.load %arg6[%c0_14, %c0_15] : memref<16x32xf32, #tpu.memory_space<vmem>>, vector<16x32xf32>
    tpu.vector_store %arg6[%c0_14, %c0_15], %23 {strides = array<i32>} : memref<16x32xf32, #tpu.memory_space<vmem>>, vector<16x32xf32>,
    return
  }
  func.func @transform_0(%arg0: i32) -> (i32, i32) {
    %c0_i32 = arith.constant 0 : i32
    %c0_i32_0 = arith.constant 0 : i32
    return %arg0, %c0_i32 : i32, i32
  }
  func.func @transform_1(%arg0: i32) -> (i32, i32) {
    %c0_i32 = arith.constant 0 : i32
    %c0_i32_0 = arith.constant 0 : i32
    %c0_i32_1 = arith.constant 0 : i32
    return %c0_i32, %c0_i32_0 : i32, i32
  }
  func.func @transform_2(%arg0: i32) -> (i32, i32) {
    %c0_i32 = arith.constant 0 : i32
    %c0_i32_0 = arith.constant 0 : i32
    %c0_i32_1 = arith.constant 0 : i32
    return %c0_i32, %c0_i32_0 : i32, i32
  }
  func.func @transform_3(%arg0: i32) -> (i32, i32) {
    %c0_i32 = arith.constant 0 : i32
    %c0_i32_0 = arith.constant 0 : i32
    %c0_i32_1 = arith.constant 0 : i32
    return %c0_i32, %c0_i32_0 : i32, i32
  }
  func.func @transform_4(%arg0: i32) -> (i32, i32) {
    %c0_i32 = arith.constant 0 : i32
    %c0_i32_0 = arith.constant 0 : i32
    %c0_i32_1 = arith.constant 0 : i32
    return %c0_i32, %c0_i32_0 : i32, i32
  }
  func.func @transform_5(%arg0: i32) -> (i32, i32) {
    %c0_i32 = arith.constant 0 : i32
    %c0_i32_0 = arith.constant 0 : i32
    return %arg0, %c0_i32 : i32, i32
  }
}

</mosaic_0001>

<llo_original>
// kernel: tpu_custom_call.1
$region0: #{tpu_custom_call.1}
  #allocation0 [shape = 'u32[]', space=smem, size = 0x4, offset = 0x4, fixed_abs, tag = 'smem constant byte address 0x4 - core index']
  #allocation1 [shape = 'u32[144,128]{1,0:T(1,128)}', space=vmem, size = 0x12000, scoped, tag = 'internal scratch']
  %s0 = inlined_call_operand.vmem [shape: f32[16,32], index: 0, kind: input, shape index: {}]
  %s1 = inlined_call_operand.vmem [shape: f32[32,128], index: 1, kind: input, shape index: {}]
  %s2 = inlined_call_operand.vmem [shape: f32[1,128], index: 2, kind: input, shape index: {}]
  %s3 = inlined_call_operand.vmem [shape: f32[128,32], index: 3, kind: input, shape index: {}]
  %s4 = inlined_call_operand.vmem [shape: f32[1,32], index: 4, kind: input, shape index: {}]
  %s5 = inlined_call_operand.hbm [shape: f32[16,32], index: 5, kind: output, shape index: {}]
  %s6 = sld [smem:[#allocation0]]
  $region30: #{tpu_custom_call.1} parent=0
    _
  %s8 = ssub.s32 1, %s6
  %s9 = scalar_select 0, %s8, %s6
  $region1: #{tpu_custom_call.1} parent=0
    #allocation2 [shape = 'u8[8192]{0}', space=vmem, size = 0x2000, scoped, tag = 'output window, operand 0, single buffered']
    #allocation3 [shape = 's32[1]{0}', space=sflag, size = 0x4, scoped, tag = 'scoped memory for tpu_custom_call.1']
    %10 = vsyncpa [#allocation3], 0
    // Predicated region
    $region2: #{tpu_custom_call.1} parent=1 // pred_check
      _
    $region3: #{tpu_custom_call.1} parent=1 // pred_check_branch
      %12 = sbr.rel (0) target = $region5
    $region4: #{tpu_custom_call.1} parent=1 // pred_region
      _
    $region5: #{tpu_custom_call.1} parent=1 // pred_fallthru
      _
    // Predicated region
    $region6: #{tpu_custom_call.1} parent=1 // pred_check
      _
    $region7: #{tpu_custom_call.1} parent=1 // pred_check_branch
      %14 = sbr.rel (0) target = $region9
    $region8: #{tpu_custom_call.1} parent=1 // pred_region
      _
    $region9: #{tpu_custom_call.1} parent=1 // pred_fallthru
      _
    // Predicated region
    $region10: #{tpu_custom_call.1} parent=1 // pred_check
      _
    $region11: #{tpu_custom_call.1} parent=1 // pred_check_branch
      %16 = sbr.rel (0) target = $region13
    $region12: #{tpu_custom_call.1} parent=1 // pred_region
      _
    $region13: #{tpu_custom_call.1} parent=1 // pred_fallthru
      _
    // Predicated region
    $region14: #{tpu_custom_call.1} parent=1 // pred_check
      _
    $region15: #{tpu_custom_call.1} parent=1 // pred_check_branch
      %18 = sbr.rel (0) target = $region17
    $region16: #{tpu_custom_call.1} parent=1 // pred_region
      _
    $region17: #{tpu_custom_call.1} parent=1 // pred_fallthru
      _
    // Predicated region
    $region18: #{tpu_custom_call.1} parent=1 // pred_check
      _
    $region19: #{tpu_custom_call.1} parent=1 // pred_check_branch
      %20 = sbr.rel (0) target = $region21
    $region20: #{tpu_custom_call.1} parent=1 // pred_region
      _
    $region21: #{tpu_custom_call.1} parent=1 // pred_fallthru
      _
    %v21 = vld [vmem:[%s0] sm:$0xff]
    %v22 = vld [vmem:[%s0 + $0x8] sm:$0xff]
    %v23 = vld [vmem:[%s1] sm:$0xff]
    %v24 = vld [vmem:[%s1 + $0x8] sm:$0xff]
    %v25 = vld [vmem:[%s1 + $0x10] sm:$0xff]
    %v26 = vld [vmem:[%s1 + $0x18] sm:$0xff]
    %v27 = vld [vmem:[%s2] sm:$0x1]
    %v29 = vlaneseq
    %v30 = vshrl.u32 %v29, 7
    %v31 = vsub.s32 0, %v30
    %v32 = vrot.slane %v27, %v31
    %vm34 = vcmask 261120
    %v36 = vsel %vm34, %v21, 0
    %v39 = vsel %vm34, %v22, 0
    %41 = vmatprep.subr.mxu0 0.0
    %42 = vmatpush1.msra.mxu0 0.0
    %43 = vmatprep.subr.mxu0 0.0
    %44 = vmatpush1.msra.mxu0 0.0
    %45 = vmatprep.subr.mxu0 0.0
    %46 = vmatpush1.msra.mxu0 0.0
    %47 = vmatprep.subr.mxu0 0.0
    %48 = vmatpush1.msra.mxu0 0.0
    %49 = vmatprep.subr.mxu0 0.0
    %50 = vmatpush1.msra.mxu0 0.0
    %51 = vmatprep.subr.mxu0 0.0
    %52 = vmatpush1.msra.mxu0 0.0
    %53 = vmatprep.subr.mxu0 0.0
    %54 = vmatpush1.msra.mxu0 0.0
    %55 = vmatprep.subr.mxu0 0.0
    %56 = vmatpush1.msra.mxu0 0.0
    %57 = vmatprep.subr.mxu0 0.0
    %58 = vmatpush1.msra.mxu0 0.0
    %59 = vmatprep.subr.mxu0 0.0
    %60 = vmatpush1.msra.mxu0 0.0
    %61 = vmatprep.subr.mxu0 0.0
    %62 = vmatpush1.msra.mxu0 0.0
    %63 = vmatprep.subr.mxu0 0.0
    %64 = vmatpush1.msra.mxu0 0.0
    %65 = vmatprep.subr.mxu0 0.0
    %66 = vmatpush1.msra.mxu0 %v26
    %67 = vmatprep.subr.mxu0 0.0
    %68 = vmatpush1.msra.mxu0 %v25
    %69 = vmatprep.subr.mxu0 0.0
    %70 = vmatpush1.msra.mxu0 %v24
    %71 = vmatprep.subr.mxu0 0.0
    %72 = vmatpush1.msra.mxu0 %v23
    %73 = vmatprep.subr.mxu0 0.0
    %74 = vmatpush2.msra.mxu0 0.0
    %75 = vmatprep.subr.mxu0 0.0
    %76 = vmatpush2.msra.mxu0 0.0
    %77 = vmatprep.subr.mxu0 0.0
    %78 = vmatpush2.msra.mxu0 0.0
    %79 = vmatprep.subr.mxu0 0.0
    %80 = vmatpush2.msra.mxu0 0.0
    %81 = vmatprep.subr.mxu0 0.0
    %82 = vmatpush2.msra.mxu0 0.0
    %83 = vmatprep.subr.mxu0 0.0
    %84 = vmatpush2.msra.mxu0 0.0
    %85 = vmatprep.subr.mxu0 0.0
    %86 = vmatpush2.msra.mxu0 0.0
    %87 = vmatprep.subr.mxu0 0.0
    %88 = vmatpush2.msra.mxu0 0.0
    %89 = vmatprep.subr.mxu0 0.0
    %90 = vmatpush2.msra.mxu0 0.0
    %91 = vmatprep.subr.mxu0 0.0
    %92 = vmatpush2.msra.mxu0 0.0
    %93 = vmatprep.subr.mxu0 0.0
    %94 = vmatpush2.msra.mxu0 0.0
    %95 = vmatprep.subr.mxu0 0.0
    %96 = vmatpush2.msra.mxu0 0.0
    %97 = vmatprep.subr.mxu0 0.0
    %98 = vmatpush2.msra.mxu0 0.0
    %99 = vmatprep.subr.mxu0 0.0
    %100 = vmatpush2.msra.mxu0 0.0
    %101 = vmatprep.subr.mxu0 0.0
    %102 = vmatpush2.msra.mxu0 0.0
    %103 = vmatprep.subr.mxu0 0.0
    %104 = vmatpush2.msra.mxu0 0.0
    %105 = vmatprep.mubr.f32.mxu0 0.0
    %106 = vmatmul.mubr.f32.gmra.mxu0 %v36
    %v107 = vpop.f32.mrf.mxu0
    %v108 = vadd.f32 %v32, %v107
    %v109 = vpop.f32.mrf.mxu0
    %110 = vmatprep.mubr.f32.mxu0 0.0
    %111 = vmatmul.mubr.f32.gmra.mxu0 %v39
    %v112 = vpop.f32.mrf.mxu0
    %v113 = vadd.f32 %v32, %v112
    %v114 = vpop.f32.mrf.mxu0
    %115 = vdwg.mxu0
    %v116 = vmul.f32 %v108, 0.5
    %v117 = vmul.f32 %v113, 0.5
    %v118 = vmul.f32 %v108, 0.044715
    %v119 = vmul.f32 %v113, 0.044715
    %v120 = vmul.f32 %v118, %v108
    %v121 = vmul.f32 %v119, %v113
    %v122 = vmul.f32 %v120, %v108
    %v123 = vmul.f32 %v121, %v113
    %v124 = vadd.f32 %v108, %v122
    %v125 = vadd.f32 %v113, %v123
    %v126 = vmul.f32 %v124, 0.7978846
    %v127 = vmul.f32 %v125, 0.7978846
    %v128 = vtanh.pop %v126
    %v129 = vtanh.pop %v127
    %v130 = vadd.f32 %v128, 1.0
    %v131 = vadd.f32 %v129, 1.0
    %v132 = vmul.f32 %v116, %v130
    %v133 = vmul.f32 %v117, %v131
    %v134 = vld [vmem:[%s3] sm:$0xff]
    %v135 = vld [vmem:[%s3 + $0x8] sm:$0xff]
    %v136 = vld [vmem:[%s3 + $0x10] sm:$0xff]
    %v137 = vld [vmem:[%s3 + $0x18] sm:$0xff]
    %v138 = vld [vmem:[%s3 + $0x20] sm:$0xff]
    %v139 = vld [vmem:[%s3 + $0x28] sm:$0xff]
    %v140 = vld [vmem:[%s3 + $0x30] sm:$0xff]
    %v141 = vld [vmem:[%s3 + $0x38] sm:$0xff]
    %v142 = vld [vmem:[%s3 + $0x40] sm:$0xff]
    %v143 = vld [vmem:[%s3 + $0x48] sm:$0xff]
    %v144 = vld [vmem:[%s3 + $0x50] sm:$0xff]
    %v145 = vld [vmem:[%s3 + $0x58] sm:$0xff]
    %v146 = vld [vmem:[%s3 + $0x60] sm:$0xff]
    %v147 = vld [vmem:[%s3 + $0x68] sm:$0xff]
    %v148 = vld [vmem:[%s3 + $0x70] sm:$0xff]
    %v149 = vld [vmem:[%s3 + $0x78] sm:$0xff]
    %v150 = vld [vmem:[%s4] sm:$0x1]
    %v152 = vlaneseq
    %v153 = vshrl.u32 %v152, 7
    %v154 = vsub.s32 0, %v153
    %v155 = vrot.slane %v150, %v154
    %157 = vmatprep.subr.mxu0 0.0
    %158 = vmatpush1.msra.mxu0 %v149
    %159 = vmatprep.subr.mxu0 0.0
    %160 = vmatpush1.msra.mxu0 %v148
    %161 = vmatprep.subr.mxu0 0.0
    %162 = vmatpush1.msra.mxu0 %v147
    %163 = vmatprep.subr.mxu0 0.0
    %164 = vmatpush1.msra.mxu0 %v146
    %165 = vmatprep.subr.mxu0 0.0
    %166 = vmatpush1.msra.mxu0 %v145
    %167 = vmatprep.subr.mxu0 0.0
    %168 = vmatpush1.msra.mxu0 %v144
    %169 = vmatprep.subr.mxu0 0.0
    %170 = vmatpush1.msra.mxu0 %v143
    %171 = vmatprep.subr.mxu0 0.0
    %172 = vmatpush1.msra.mxu0 %v142
    %173 = vmatprep.subr.mxu0 0.0
    %174 = vmatpush1.msra.mxu0 %v141
    %175 = vmatprep.subr.mxu0 0.0
    %176 = vmatpush1.msra.mxu0 %v140
    %177 = vmatprep.subr.mxu0 0.0
    %178 = vmatpush1.msra.mxu0 %v139
    %179 = vmatprep.subr.mxu0 0.0
    %180 = vmatpush1.msra.mxu0 %v138
    %181 = vmatprep.subr.mxu0 0.0
    %182 = vmatpush1.msra.mxu0 %v137
    %183 = vmatprep.subr.mxu0 0.0
    %184 = vmatpush1.msra.mxu0 %v136
    %185 = vmatprep.subr.mxu0 0.0
    %186 = vmatpush1.msra.mxu0 %v135
    %187 = vmatprep.subr.mxu0 0.0
    %188 = vmatpush1.msra.mxu0 %v134
    %189 = vmatprep.subr.mxu0 0.0
    %190 = vmatpush2.msra.mxu0 0.0
    %191 = vmatprep.subr.mxu0 0.0
    %192 = vmatpush2.msra.mxu0 0.0
    %193 = vmatprep.subr.mxu0 0.0
    %194 = vmatpush2.msra.mxu0 0.0
    %195 = vmatprep.subr.mxu0 0.0
    %196 = vmatpush2.msra.mxu0 0.0
    %197 = vmatprep.subr.mxu0 0.0
    %198 = vmatpush2.msra.mxu0 0.0
    %199 = vmatprep.subr.mxu0 0.0
    %200 = vmatpush2.msra.mxu0 0.0
    %201 = vmatprep.subr.mxu0 0.0
    %202 = vmatpush2.msra.mxu0 0.0
    %203 = vmatprep.subr.mxu0 0.0
    %204 = vmatpush2.msra.mxu0 0.0
    %205 = vmatprep.subr.mxu0 0.0
    %206 = vmatpush2.msra.mxu0 0.0
    %207 = vmatprep.subr.mxu0 0.0
    %208 = vmatpush2.msra.mxu0 0.0
    %209 = vmatprep.subr.mxu0 0.0
    %210 = vmatpush2.msra.mxu0 0.0
    %211 = vmatprep.subr.mxu0 0.0
    %212 = vmatpush2.msra.mxu0 0.0
    %213 = vmatprep.subr.mxu0 0.0
    %214 = vmatpush2.msra.mxu0 0.0
    %215 = vmatprep.subr.mxu0 0.0
    %216 = vmatpush2.msra.mxu0 0.0
    %217 = vmatprep.subr.mxu0 0.0
    %218 = vmatpush2.msra.mxu0 0.0
    %219 = vmatprep.subr.mxu0 0.0
    %220 = vmatpush2.msra.mxu0 0.0
    %221 = vmatprep.mubr.f32.mxu0 0.0
    %222 = vmatmul.mubr.f32.gmra.mxu0 %v132
    %v223 = vpop.f32.mrf.mxu0
    %v224 = vadd.f32 %v155, %v223
    %v225 = vpop.f32.mrf.mxu0
    %226 = vmatprep.mubr.f32.mxu0 0.0
    %227 = vmatmul.mubr.f32.gmra.mxu0 %v133
    %v228 = vpop.f32.mrf.mxu0
    %v229 = vadd.f32 %v155, %v228
    %v230 = vpop.f32.mrf.mxu0
    %231 = vdwg.mxu0
    %232 = vst.msk [vmem:[#allocation2] sm:$0xff] %vm34, %v224
    %233 = vst.msk [vmem:[#allocation2 + $0x8] sm:$0xff] %vm34, %v229
    // Predicated region
    $region22: #{tpu_custom_call.1} parent=1 // pred_check
      _
    $region23: #{tpu_custom_call.1} parent=1 // pred_check_branch
      %235 = sbr.rel (0) target = $region25
    $region24: #{tpu_custom_call.1} parent=1 // pred_region
      %s237 = ssub.s32 256, 256
      %238 = vsyncadd [#allocation3], %s237
      %s239 = sshll.u32 [#allocation2], 4
      %s240 = int_to_ptr.vmem [resolvable:$true] %s239
      %245 = dma.vmem_to_hbm [thread:$0]  %s240, 256, %s5, [#allocation3], 128, 128, 8
    $region25: #{tpu_custom_call.1} parent=1 // pred_fallthru
      _
    // Predicated region
    $region26: #{tpu_custom_call.1} parent=1 // pred_check
      _
    $region27: #{tpu_custom_call.1} parent=1 // pred_check_branch
      %247 = sbr.rel (0) target = $region29
    $region28: #{tpu_custom_call.1} parent=1 // pred_region
      %248 = dma.done [#allocation3], 256
    $region29: #{tpu_custom_call.1} parent=1 // pred_fallthru
      _
    %249 = vsyncpa [#allocation3], 1

</llo_original>
